<compile_context>
chip_gen: v7x
topology: tpu7x:2x2x1
jax: 0.10.0
libtpu: 0.0.40
codegen_flags: <defaults>
</compile_context>

<pallas_src>
import jax
import jax.numpy as jnp
from jax.experimental import pallas as pl
from jax.experimental.pallas import tpu as pltpu


# ----------------------------------------------------------------------------- kernel body
def _fused_heads_kernel(x_ref, w1_ref, b1_ref, w2_ref, b2_ref, o_ref):
    # x_ref : (TB, F)      shared features (tile of the batch, or all of it)
    # w1_ref: (F, T*F)     all first-layer weights, task-major along the lane axis
    # b1_ref: (1, T*F)     all first-layer biases
    # w2_ref: (T*F, T)     block-diagonal second-layer weights
    # b2_ref: (1, T)       second-layer biases
    # o_ref : (TB, T)      sigmoid outputs, one column per task
    x = x_ref[...]
    h = jnp.dot(x, w1_ref[...], preferred_element_type=jnp.float32) + b1_ref[...]
    h = jnp.maximum(h, 0.0)                                              # ReLU (VPU)
    z = jnp.dot(h, w2_ref[...], preferred_element_type=jnp.float32) + b2_ref[...]
    o_ref[...] = jax.nn.sigmoid(z).astype(o_ref.dtype)                   # Sigmoid (EUP)


# ----------------------------------------------------------------------------- init-time packing
def pack_params(w1, b1, w2, b2):
    """Pack per-task parameters once, at parameter-init time (NOT per forward).

    w1: (T, F, F); b1: (T, F); w2: (T, F, 1); b2: (T, 1)
    Returns (w1f (F, T*F), b1f (1, T*F), w2bd (T*F, T), b2f (1, T)).
    """
    T, F, _ = w1.shape
    # Columns [t*F:(t+1)*F] of w1f belong to head t:  w1f[f, t*F+g] = w1[t, f, g]
    w1f = jnp.transpose(w1, (1, 0, 2)).reshape(F, T * F)
    b1f = b1.reshape(1, T * F)
    # Block-diagonal second layer: z[:, t] = sum_f h[:, t*F+f] * w2[t, f]
    w2_flat = w2.reshape(T, F)
    eye = jnp.eye(T, dtype=w2.dtype)
    w2bd = (w2_flat[:, :, None] * eye[:, None, :]).reshape(T * F, T)
    b2f = b2.reshape(1, T)
    return w1f, b1f, w2bd, b2f


# ----------------------------------------------------------------------------- forward wrappers
def multi_task_decoder_head_fused(x, packed, *, batch_tile=None):
    """x: (B, F); packed = pack_params(...).  Returns a (B, T) array, column t = head t."""
    w1f, b1f, w2bd, b2f = packed
    B, F = x.shape
    TF = w1f.shape[1]
    T = b2f.shape[1]

    cost = pl.CostEstimate(
        flops=2 * B * F * TF + 2 * B * TF * T,
        transcendentals=B * T,
        bytes_accessed=4 * (B * F + F * TF + TF + TF * T + T + B * T),
    )

    if batch_tile is None or batch_tile >= B:
        # Small-batch path: no grid, no pipelining ceremony — everything lives in VMEM.
        vmem = pl.BlockSpec(memory_space=pltpu.MemorySpace.VMEM)
        return pl.pallas_call(
            _fused_heads_kernel,
            out_shape=jax.ShapeDtypeStruct((B, T), x.dtype),
            in_specs=[vmem, vmem, vmem, vmem, vmem],
            out_specs=vmem,
            cost_estimate=cost,
        )(x, w1f, b1f, w2bd, b2f)

    # Large-batch path: stream x / out over a batch grid, weights stay VMEM-resident
    # (constant block index -> fetched once), batch axis parallel for megacore (v7x).
    TB = batch_tile
    return pl.pallas_call(
        _fused_heads_kernel,
        out_shape=jax.ShapeDtypeStruct((B, T), x.dtype),
        grid=(pl.cdiv(B, TB),),
        in_specs=[
            pl.BlockSpec((TB, F), lambda i: (i, 0)),
            pl.BlockSpec((F, TF), lambda i: (0, 0)),
            pl.BlockSpec((1, TF), lambda i: (0, 0)),
            pl.BlockSpec((TF, T), lambda i: (0, 0)),
            pl.BlockSpec((1, T), lambda i: (0, 0)),
        ],
        out_specs=pl.BlockSpec((TB, T), lambda i: (i, 0)),
        compiler_params=pltpu.CompilerParams(
            dimension_semantics=("parallel",),
        ),
        cost_estimate=cost,
    )(x, w1f, b1f, w2bd, b2f)


def multi_task_decoder_head(x, packed, *, batch_tile=None):
    """Matches the PyTorch forward: returns a list of T arrays of shape (B, 1)."""
    out = multi_task_decoder_head_fused(x, packed, batch_tile=batch_tile)
    return jnp.split(out, out.shape[1], axis=1)


# ----------------------------------------------------------------------------- reference
def _reference(x, w1, b1, w2, b2):
    outs = []
    for t in range(w1.shape[0]):
        h = jnp.maximum(x @ w1[t] + b1[t], 0.0)
        z = h @ w2[t] + b2[t]
        outs.append(jax.nn.sigmoid(z))
    return outs


if __name__ == "__main__":
    T = 5            # number of tasks (fixed in the module)
    B = 8            # batch
    F = 32           # num_shared_features

    key = jax.random.PRNGKey(0)
    kx, kw1, kb1, kw2, kb2 = jax.random.split(key, 5)

    x = jax.random.normal(kx, (B, F), dtype=jnp.float32)
    scale = 1.0 / jnp.sqrt(jnp.float32(F))
    w1 = jax.random.normal(kw1, (T, F, F), dtype=jnp.float32) * scale
    b1 = jax.random.normal(kb1, (T, F), dtype=jnp.float32) * 0.01
    w2 = jax.random.normal(kw2, (T, F, 1), dtype=jnp.float32) * scale
    b2 = jax.random.normal(kb2, (T, 1), dtype=jnp.float32) * 0.01

    # Pack once at "init" time — not part of the per-forward hot path.
    packed = jax.tree_util.tree_map(jax.block_until_ready, pack_params(w1, b1, w2, b2))

    # --- small-batch (no grid) path --------------------------------------------------------
    outs = multi_task_decoder_head(x, packed)
    outs = [jax.block_until_ready(o) for o in outs]
    refs = _reference(x, w1, b1, w2, b2)
    for o, r in zip(outs, refs):
        assert o.shape == (B, 1)
        assert jnp.allclose(o, r, atol=1e-5, rtol=1e-5)

    # --- batch-tiled path (exercised at a modest batch so it stays a small test) -----------
    B_big = 256
    x_big = jax.random.normal(jax.random.PRNGKey(1), (B_big, F), dtype=jnp.float32)
    outs_big = multi_task_decoder_head(x_big, packed, batch_tile=128)
    outs_big = [jax.block_until_ready(o) for o in outs_big]
    refs_big = _reference(x_big, w1, b1, w2, b2)
    for o, r in zip(outs_big, refs_big):
        assert o.shape == (B_big, 1)
        assert jnp.allclose(o, r, atol=1e-5, rtol=1e-5)

    print("KERNEL_OK")
</pallas_src>

<mosaic_0001>
module attributes {stable_mosaic.version = 11 : i64} {
  func.func @_fused_heads_kernel(%arg0: memref<8x32xf32, #tpu.memory_space<vmem>>, %arg1: memref<32x160xf32, #tpu.memory_space<vmem>>, %arg2: memref<1x160xf32, #tpu.memory_space<vmem>>, %arg3: memref<160x5xf32, #tpu.memory_space<vmem>>, %arg4: memref<1x5xf32, #tpu.memory_space<vmem>>, %arg5: memref<8x5xf32, #tpu.memory_space<vmem>>) attributes {dimension_semantics = [], scalar_prefetch = 0 : i64, scratch_operands = 0 : i64, tpu.core_type = #tpu.core_type<tc>} {
    %c0 = arith.constant 0 : index
    %c0_0 = arith.constant 0 : index
    %0 = vector.load %arg0[%c0, %c0_0] : memref<8x32xf32, #tpu.memory_space<vmem>>, vector<8x32xf32>
    %c0_1 = arith.constant 0 : index
    %c0_2 = arith.constant 0 : index
    %1 = vector.load %arg1[%c0_1, %c0_2] : memref<32x160xf32, #tpu.memory_space<vmem>>, vector<32x160xf32>
    %cst = arith.constant dense<0.000000e+00> : vector<8x160xf32>
    %2 = tpu.matmul %0, %1, %cst {dimension_numbers = #tpu.dot_dimension_numbers<[1], [0], [0], [1], [0, 0, 1, 1], [], []>} : vector<8x32xf32>, vector<32x160xf32>, vector<8x160xf32> -> vector<8x160xf32>
    %c0_3 = arith.constant 0 : index
    %c0_4 = arith.constant 0 : index
    %3 = vector.load %arg2[%c0_3, %c0_4] : memref<1x160xf32, #tpu.memory_space<vmem>>, vector<1x160xf32>
    %4 = vector.broadcast %3 : vector<1x160xf32> to vector<8x160xf32>
    %5 = arith.addf %2, %4 : vector<8x160xf32>
    %cst_5 = arith.constant 0.000000e+00 : f32
    %6 = vector.broadcast %cst_5 : f32 to vector<8x160xf32>
    %7 = arith.maximumf %5, %6 : vector<8x160xf32>
    %c0_6 = arith.constant 0 : index
    %c0_7 = arith.constant 0 : index
    %8 = vector.load %arg3[%c0_6, %c0_7] : memref<160x5xf32, #tpu.memory_space<vmem>>, vector<160x5xf32>
    %cst_8 = arith.constant dense<0.000000e+00> : vector<8x5xf32>
    %9 = tpu.matmul %7, %8, %cst_8 {dimension_numbers = #tpu.dot_dimension_numbers<[1], [0], [0], [1], [0, 0, 1, 1], [], []>} : vector<8x160xf32>, vector<160x5xf32>, vector<8x5xf32> -> vector<8x5xf32>
    %c0_9 = arith.constant 0 : index
    %c0_10 = arith.constant 0 : index
    %10 = vector.load %arg4[%c0_9, %c0_10] : memref<1x5xf32, #tpu.memory_space<vmem>>, vector<1x5xf32>
    %11 = vector.broadcast %10 : vector<1x5xf32> to vector<8x5xf32>
    %12 = arith.addf %9, %11 : vector<8x5xf32>
    %13 = arith.negf %12 : vector<8x5xf32>
    %14 = math.exp %13 : vector<8x5xf32>
    %cst_11 = arith.constant 1.000000e+00 : f32
    %15 = vector.broadcast %cst_11 : f32 to vector<8x5xf32>
    %16 = arith.addf %15, %14 : vector<8x5xf32>
    %17 = arith.divf %15, %16 : vector<8x5xf32>
    %c0_12 = arith.constant 0 : index
    %c0_13 = arith.constant 0 : index
    %18 = vector.load %arg5[%c0_12, %c0_13] : memref<8x5xf32, #tpu.memory_space<vmem>>, vector<8x5xf32>
    tpu.vector_store %arg5[%c0_12, %c0_13], %17 {strides = array<i32>} : memref<8x5xf32, #tpu.memory_space<vmem>>, vector<8x5xf32>,
    return
  }
}

</mosaic_0001>

<llo_original>
// kernel: tpu_custom_call.1
$region0: #{tpu_custom_call.1}
  #allocation0 [shape = 'u32[]', space=smem, size = 0x4, offset = 0x4, fixed_abs, tag = 'smem constant byte address 0x4 - core index']
  #allocation1 [shape = 'u32[144,128]{1,0:T(1,128)}', space=vmem, size = 0x12000, scoped, tag = 'internal scratch']
  %s0 = inlined_call_operand.vmem [shape: f32[8,32], index: 0, kind: input, shape index: {}]
  %s1 = inlined_call_operand.vmem [shape: f32[32,160], index: 1, kind: input, shape index: {}]
  %s2 = inlined_call_operand.vmem [shape: f32[1,160], index: 2, kind: input, shape index: {}]
  %s3 = inlined_call_operand.vmem [shape: f32[160,5], index: 3, kind: input, shape index: {}]
  %s4 = inlined_call_operand.vmem [shape: f32[1,5], index: 4, kind: input, shape index: {}]
  %s5 = inlined_call_operand.hbm [shape: f32[8,5], index: 5, kind: output, shape index: {}]
  %s6 = sld [smem:[#allocation0]]
  $region30: #{tpu_custom_call.1} parent=0
    _
  %s8 = ssub.s32 1, %s6
  %s9 = scalar_select 0, %s8, %s6
  $region1: #{tpu_custom_call.1} parent=0
    #allocation2 [shape = 'u8[4096]{0}', space=vmem, size = 0x1000, scoped, tag = 'output window, operand 0, single buffered']
    #allocation3 [shape = 's32[1]{0}', space=sflag, size = 0x4, scoped, tag = 'scoped memory for tpu_custom_call.1']
    %10 = vsyncpa [#allocation3], 0
    // Predicated region
    $region2: #{tpu_custom_call.1} parent=1 // pred_check
      _
    $region3: #{tpu_custom_call.1} parent=1 // pred_check_branch
      %12 = sbr.rel (0) target = $region5
    $region4: #{tpu_custom_call.1} parent=1 // pred_region
      _
    $region5: #{tpu_custom_call.1} parent=1 // pred_fallthru
      _
    // Predicated region
    $region6: #{tpu_custom_call.1} parent=1 // pred_check
      _
    $region7: #{tpu_custom_call.1} parent=1 // pred_check_branch
      %14 = sbr.rel (0) target = $region9
    $region8: #{tpu_custom_call.1} parent=1 // pred_region
      _
    $region9: #{tpu_custom_call.1} parent=1 // pred_fallthru
      _
    // Predicated region
    $region10: #{tpu_custom_call.1} parent=1 // pred_check
      _
    $region11: #{tpu_custom_call.1} parent=1 // pred_check_branch
      %16 = sbr.rel (0) target = $region13
    $region12: #{tpu_custom_call.1} parent=1 // pred_region
      _
    $region13: #{tpu_custom_call.1} parent=1 // pred_fallthru
      _
    // Predicated region
    $region14: #{tpu_custom_call.1} parent=1 // pred_check
      _
    $region15: #{tpu_custom_call.1} parent=1 // pred_check_branch
      %18 = sbr.rel (0) target = $region17
    $region16: #{tpu_custom_call.1} parent=1 // pred_region
      _
    $region17: #{tpu_custom_call.1} parent=1 // pred_fallthru
      _
    // Predicated region
    $region18: #{tpu_custom_call.1} parent=1 // pred_check
      _
    $region19: #{tpu_custom_call.1} parent=1 // pred_check_branch
      %20 = sbr.rel (0) target = $region21
    $region20: #{tpu_custom_call.1} parent=1 // pred_region
      _
    $region21: #{tpu_custom_call.1} parent=1 // pred_fallthru
      _
    %v21 = vld [vmem:[%s0] sm:$0xff]
    %v22 = vld [vmem:[%s1] sm:$0xff]
    %v23 = vld [vmem:[%s1 + $0x8] sm:$0xff]
    %v24 = vld [vmem:[%s1 + $0x10] sm:$0xff]
    %v25 = vld [vmem:[%s1 + $0x18] sm:$0xff]
    %v26 = vld [vmem:[%s1 + $0x20] sm:$0xff]
    %v27 = vld [vmem:[%s1 + $0x28] sm:$0xff]
    %v28 = vld [vmem:[%s1 + $0x30] sm:$0xff]
    %v29 = vld [vmem:[%s1 + $0x38] sm:$0xff]
    %v30 = vld [vmem:[%s2] sm:$0x3]
    %v32 = vlaneseq
    %v33 = vshrl.u32 %v32, 7
    %v34 = vsub.s32 0, %v33
    %v35 = vrot.slane %v30, %v34
    %v36 = vlaneseq
    %v37 = vshrl.u32 %v36, 7
    %v38 = vsub.s32 1, %v37
    %v39 = vrot.slane %v30, %v38
    %vm42 = vcmask 261120
    %v44 = vsel %vm42, %v21, 0
    %46 = vmatprep.subr.mxu0 %v23
    %47 = vmatpush1.msra.mxu0 %v22
    %48 = vmatprep.subr.mxu0 %v25
    %49 = vmatpush1.msra.mxu0 %v24
    %50 = vmatprep.subr.mxu0 %v27
    %51 = vmatpush1.msra.mxu0 %v26
    %52 = vmatprep.subr.mxu0 %v29
    %53 = vmatpush1.msra.mxu0 %v28
    %54 = vmatprep.subr.mxu0 0.0
    %55 = vmatpush1.msra.mxu0 0.0
    %56 = vmatprep.subr.mxu0 0.0
    %57 = vmatpush1.msra.mxu0 0.0
    %58 = vmatprep.subr.mxu0 0.0
    %59 = vmatpush1.msra.mxu0 0.0
    %60 = vmatprep.subr.mxu0 0.0
    %61 = vmatpush1.msra.mxu0 0.0
    %62 = vmatprep.subr.mxu0 0.0
    %63 = vmatpush1.msra.mxu0 0.0
    %64 = vmatprep.subr.mxu0 0.0
    %65 = vmatpush1.msra.mxu0 0.0
    %66 = vmatprep.subr.mxu0 0.0
    %67 = vmatpush1.msra.mxu0 0.0
    %68 = vmatprep.subr.mxu0 0.0
    %69 = vmatpush1.msra.mxu0 0.0
    %70 = vmatprep.subr.mxu0 0.0
    %71 = vmatpush1.msra.mxu0 0.0
    %72 = vmatprep.subr.mxu0 0.0
    %73 = vmatpush1.msra.mxu0 0.0
    %74 = vmatprep.subr.mxu0 0.0
    %75 = vmatpush1.msra.mxu0 0.0
    %76 = vmatprep.subr.mxu0 0.0
    %77 = vmatpush1.msra.mxu0 0.0
    %78 = vmatprep.subr.mxu0 0.0
    %79 = vmatpush1.msra.mxu0 0.0
    %80 = vmatprep.subr.mxu0 0.0
    %81 = vmatpush1.msra.mxu0 0.0
    %82 = vmatprep.subr.mxu0 0.0
    %83 = vmatpush1.msra.mxu0 0.0
    %84 = vmatprep.subr.mxu0 0.0
    %85 = vmatpush1.msra.mxu0 0.0
    %86 = vmatprep.subr.mxu0 0.0
    %87 = vmatpush1.msra.mxu0 0.0
    %88 = vmatprep.subr.mxu0 0.0
    %89 = vmatpush1.msra.mxu0 0.0
    %90 = vmatprep.subr.mxu0 0.0
    %91 = vmatpush1.msra.mxu0 0.0
    %92 = vmatprep.subr.mxu0 0.0
    %93 = vmatpush1.msra.mxu0 0.0
    %94 = vmatprep.subr.mxu0 0.0
    %95 = vmatpush1.msra.mxu0 0.0
    %96 = vmatprep.subr.mxu0 0.0
    %97 = vmatpush1.msra.mxu0 0.0
    %98 = vmatprep.subr.mxu0 0.0
    %99 = vmatpush1.msra.mxu0 0.0
    %100 = vmatprep.subr.mxu0 0.0
    %101 = vmatpush1.msra.mxu0 0.0
    %102 = vmatprep.subr.mxu0 0.0
    %103 = vmatpush1.msra.mxu0 0.0
    %104 = vmatprep.subr.mxu0 0.0
    %105 = vmatpush1.msra.mxu0 0.0
    %106 = vmatprep.subr.mxu0 0.0
    %107 = vmatpush1.msra.mxu0 0.0
    %108 = vmatprep.subr.mxu0 0.0
    %109 = vmatpush1.msra.mxu0 0.0
    %110 = vmatprep.mubr.f32.mxu0 0.0
    %111 = vmatmul.mubr.f32.gmra.mrb[0].mxu0 %v44
    %v112 = vpop.f32.mrb[0].mxu0
    %v113 = vadd.f32 %v35, %v112
    %v114 = vpop.f32.mrb[0].mxu0
    %v115 = vadd.f32 %v39, %v114
    %116 = vdwg.mxu0
    %v117 = vmax.f32 %v113, 0.0
    %v118 = vmax.f32 %v115, 0.0
    %v119 = vld [vmem:[%s3] sm:$0xff]
    %v120 = vld [vmem:[%s3 + $0x8] sm:$0xff]
    %v121 = vld [vmem:[%s3 + $0x10] sm:$0xff]
    %v122 = vld [vmem:[%s3 + $0x18] sm:$0xff]
    %v123 = vld [vmem:[%s3 + $0x20] sm:$0xff]
    %v124 = vld [vmem:[%s3 + $0x28] sm:$0xff]
    %v125 = vld [vmem:[%s3 + $0x30] sm:$0xff]
    %v126 = vld [vmem:[%s3 + $0x38] sm:$0xff]
    %v127 = vld [vmem:[%s3 + $0x40] sm:$0xff]
    %v128 = vld [vmem:[%s3 + $0x48] sm:$0xff]
    %v129 = vld [vmem:[%s3 + $0x50] sm:$0xff]
    %v130 = vld [vmem:[%s3 + $0x58] sm:$0xff]
    %v131 = vld [vmem:[%s3 + $0x60] sm:$0xff]
    %v132 = vld [vmem:[%s3 + $0x68] sm:$0xff]
    %v133 = vld [vmem:[%s3 + $0x70] sm:$0xff]
    %v134 = vld [vmem:[%s3 + $0x78] sm:$0xff]
    %v135 = vld [vmem:[%s3 + $0x80] sm:$0xff]
    %v136 = vld [vmem:[%s3 + $0x88] sm:$0xff]
    %v137 = vld [vmem:[%s3 + $0x90] sm:$0xff]
    %v138 = vld [vmem:[%s3 + $0x98] sm:$0xff]
    %v139 = vld [vmem:[%s4] sm:$0x1]
    %v141 = vlaneseq
    %v142 = vshrl.u32 %v141, 7
    %v143 = vsub.s32 0, %v142
    %v144 = vrot.slane %v139, %v143
    %v147 = vsel %vm42, %v118, 0
    %149 = vmatprep.subr.mxu0 0.0
    %150 = vmatpush1.msra.mxu0 %v119
    %151 = vmatprep.subr.mxu0 0.0
    %152 = vmatpush1.msra.mxu0 %v120
    %153 = vmatprep.subr.mxu0 0.0
    %154 = vmatpush1.msra.mxu0 %v121
    %155 = vmatprep.subr.mxu0 0.0
    %156 = vmatpush1.msra.mxu0 %v122
    %157 = vmatprep.subr.mxu0 0.0
    %158 = vmatpush1.msra.mxu0 %v123
    %159 = vmatprep.subr.mxu0 0.0
    %160 = vmatpush1.msra.mxu0 %v124
    %161 = vmatprep.subr.mxu0 0.0
    %162 = vmatpush1.msra.mxu0 %v125
    %163 = vmatprep.subr.mxu0 0.0
    %164 = vmatpush1.msra.mxu0 %v126
    %165 = vmatprep.subr.mxu0 0.0
    %166 = vmatpush1.msra.mxu0 %v127
    %167 = vmatprep.subr.mxu0 0.0
    %168 = vmatpush1.msra.mxu0 %v128
    %169 = vmatprep.subr.mxu0 0.0
    %170 = vmatpush1.msra.mxu0 %v129
    %171 = vmatprep.subr.mxu0 0.0
    %172 = vmatpush1.msra.mxu0 %v130
    %173 = vmatprep.subr.mxu0 0.0
    %174 = vmatpush1.msra.mxu0 %v131
    %175 = vmatprep.subr.mxu0 0.0
    %176 = vmatpush1.msra.mxu0 %v132
    %177 = vmatprep.subr.mxu0 0.0
    %178 = vmatpush1.msra.mxu0 %v133
    %179 = vmatprep.subr.mxu0 0.0
    %180 = vmatpush1.msra.mxu0 %v134
    %181 = vmatprep.subr.mxu0 0.0
    %182 = vmatpush1.msra.mxu0 %v135
    %183 = vmatprep.subr.mxu0 0.0
    %184 = vmatpush1.msra.mxu0 %v136
    %185 = vmatprep.subr.mxu0 0.0
    %186 = vmatpush1.msra.mxu0 %v137
    %187 = vmatprep.subr.mxu0 0.0
    %188 = vmatpush1.msra.mxu0 %v138
    %189 = vmatprep.subr.mxu0 0.0
    %190 = vmatpush1.msra.mxu0 0.0
    %191 = vmatprep.subr.mxu0 0.0
    %192 = vmatpush1.msra.mxu0 0.0
    %193 = vmatprep.subr.mxu0 0.0
    %194 = vmatpush1.msra.mxu0 0.0
    %195 = vmatprep.subr.mxu0 0.0
    %196 = vmatpush1.msra.mxu0 0.0
    %197 = vmatprep.subr.mxu0 0.0
    %198 = vmatpush1.msra.mxu0 0.0
    %199 = vmatprep.subr.mxu0 0.0
    %200 = vmatpush1.msra.mxu0 0.0
    %201 = vmatprep.subr.mxu0 0.0
    %202 = vmatpush1.msra.mxu0 0.0
    %203 = vmatprep.subr.mxu0 0.0
    %204 = vmatpush1.msra.mxu0 0.0
    %205 = vmatprep.subr.mxu0 0.0
    %206 = vmatpush1.msra.mxu0 0.0
    %207 = vmatprep.subr.mxu0 0.0
    %208 = vmatpush1.msra.mxu0 0.0
    %209 = vmatprep.subr.mxu0 0.0
    %210 = vmatpush1.msra.mxu0 0.0
    %211 = vmatprep.subr.mxu0 0.0
    %212 = vmatpush1.msra.mxu0 0.0
    %213 = vmatprep.mubr.f32.mxu0 %v147
    %214 = vmatmul.mubr.f32.gmra.mrb[0].mxu0 %v117
    %v215 = vpop.f32.mrb[0].mxu0
    %v216 = vadd.f32 %v144, %v215
    %v217 = vpop.f32.mrb[0].mxu0
    %218 = vdwg.mxu0
    %v219 = vxor.u32 %v216, 2147483648
    %v220 = vmul.f32 %v219, 1.442695
    %v221 = vpow.pop %v220
    %v222 = vadd.f32 %v221, 1.0
    %v223 = vrcp.pop %v222
    %v224 = vmul.f32 1.0, %v223
    %vm225 = vcmask 39936
    %226 = vst.msk [vmem:[#allocation2] sm:$0xff] %vm225, %v224
    // Predicated region
    $region22: #{tpu_custom_call.1} parent=1 // pred_check
      _
    $region23: #{tpu_custom_call.1} parent=1 // pred_check_branch
      %228 = sbr.rel (0) target = $region25
    $region24: #{tpu_custom_call.1} parent=1 // pred_region
      %s230 = ssub.s32 128, 128
      %231 = vsyncadd [#allocation3], %s230
      %s233 = sshll.u32 [#allocation2], 4
      %s234 = int_to_ptr.vmem [resolvable:$true] %s233
      %236 = dma.vmem_to_hbm [thread:$0]  %s234, 128, %s5, [#allocation3]
    $region25: #{tpu_custom_call.1} parent=1 // pred_fallthru
      _
    // Predicated region
    $region26: #{tpu_custom_call.1} parent=1 // pred_check
      _
    $region27: #{tpu_custom_call.1} parent=1 // pred_check_branch
      %238 = sbr.rel (0) target = $region29
    $region28: #{tpu_custom_call.1} parent=1 // pred_region
      %239 = dma.done [#allocation3], 128
    $region29: #{tpu_custom_call.1} parent=1 // pred_fallthru
      _
    %240 = vsyncpa [#allocation3], 1

</llo_original>
